<compile_context>
chip_gen: v6e
topology: v6e:2x2x1
jax: 0.10.0
libtpu: 0.0.40
codegen_flags: <defaults>
</compile_context>

<pallas_src>
import functools

import jax
import jax.numpy as jnp
from jax.experimental import pallas as pl
from jax.experimental.pallas import tpu as pltpu


def _round_up(n, m):
    return ((n + m - 1) // m) * m


def _rnn_kernel(x_ref, wih_ref, whh_ref, b_ref, wout_ref, bout_ref, out_ref,
                *, T, B):
    """Whole RNN forward in one kernel invocation (gridless).

    x_ref    : (T*B, D)   time-major inputs; row t*B + b == x[b, t, :]
    wih_ref  : (D,  Hp)   W_ih^T, zero-padded to Hp = round_up(H, 128) lanes
    whh_ref  : (Hp, Hp)   W_hh^T, zero-padded
    b_ref    : (1,  Hp)   b_ih + b_hh (pre-summed), zero-padded
    wout_ref : (Hp, Op)   W_out^T, zero-padded
    bout_ref : (1,  Op)   b_out, zero-padded
    out_ref  : (B,  Op)   head(last hidden state), lane-dense store
    """
    hp = whh_ref.shape[0]

    # Hoisted input projection: one MXU matmul over ALL time steps plus a
    # single bias broadcast (kept out of the recurrence).
    xw = (jnp.dot(x_ref[...], wih_ref[...], preferred_element_type=jnp.float32)
          + b_ref[...])                                     # (T*B, Hp)

    # Sequential recurrence: only h @ W_hh + tanh on the critical path.
    # T is small & static -> full unroll with static vreg slices of xw.
    # TODO(synk): for large T, switch to lax.fori_loop with xw held in a VMEM
    # scratch instead of full unrolling.
    h = jnp.zeros((B, hp), jnp.float32)
    for t in range(T):
        pre = xw[t * B:(t + 1) * B, :] + jnp.dot(
            h, whh_ref[...], preferred_element_type=jnp.float32)
        h = jnp.tanh(pre)

    # Linear head on the last hidden state (pad lanes of h are exactly zero,
    # pad rows/cols of the padded weights are zero -> result is exact).
    out_ref[...] = (jnp.dot(h, wout_ref[...],
                            preferred_element_type=jnp.float32)
                    + bout_ref[...]).astype(out_ref.dtype)


def rnn_net_forward(x, params):
    """x: (batch, seq, input_dim) float32 -> (batch, output_dim) float32."""
    B, T, D = x.shape
    H = params["w_hh"].shape[0]
    O = params["w_out"].shape[0]
    HP = _round_up(H, 128)   # pad hidden dim to a full lane width
    OP = _round_up(O, 128)   # lane-dense output store

    f32 = jnp.float32
    # Zero-padded, pre-transposed weights; biases pre-summed.  Zeros in the
    # pad region keep the padded computation identical to the unpadded one.
    wih_p = jnp.zeros((D, HP), f32).at[:, :H].set(params["w_ih"].T.astype(f32))
    whh_p = jnp.zeros((HP, HP), f32).at[:H, :H].set(params["w_hh"].T.astype(f32))
    b_p = jnp.zeros((1, HP), f32).at[0, :H].set(
        (params["b_ih"] + params["b_hh"]).astype(f32))
    wout_p = jnp.zeros((HP, OP), f32).at[:H, :O].set(
        params["w_out"].T.astype(f32))
    bout_p = jnp.zeros((1, OP), f32).at[0, :O].set(params["b_out"].astype(f32))

    # Time-major, flattened to (T*B, D): row t*B + b holds x[b, t, :].
    # (Negligible at these sizes; for large inputs accept time-major input
    #  from the caller instead of transposing here.)
    x_flat = jnp.transpose(x, (1, 0, 2)).reshape(T * B, D).astype(f32)

    kernel = functools.partial(_rnn_kernel, T=T, B=B)
    vmem = pltpu.MemorySpace.VMEM
    out_pad = pl.pallas_call(
        kernel,
        out_shape=jax.ShapeDtypeStruct((B, OP), f32),
        in_specs=[pl.BlockSpec(memory_space=vmem)] * 6,
        out_specs=pl.BlockSpec(memory_space=vmem),
    )(x_flat, wih_p, whh_p, b_p, wout_p, bout_p)

    return out_pad[:, :O]


def init_params(key, input_dim, hidden_dim, output_dim):
    """Deterministic PyTorch-style init: U(-1/sqrt(H), 1/sqrt(H))."""
    ks = jax.random.split(key, 6)
    bound = 1.0 / jnp.sqrt(hidden_dim)
    u = lambda k, shape: jax.random.uniform(
        k, shape, jnp.float32, minval=-bound, maxval=bound)
    return {
        "w_ih": u(ks[0], (hidden_dim, input_dim)),
        "w_hh": u(ks[1], (hidden_dim, hidden_dim)),
        "b_ih": u(ks[2], (hidden_dim,)),
        "b_hh": u(ks[3], (hidden_dim,)),
        "w_out": u(ks[4], (output_dim, hidden_dim)),
        "b_out": u(ks[5], (output_dim,)),
    }


def _reference_forward(x, params):
    """Pure-JAX reference (lax.scan) for correctness check."""
    B = x.shape[0]
    H = params["w_hh"].shape[0]

    def step(h, x_t):
        h_new = jnp.tanh(
            x_t @ params["w_ih"].T + params["b_ih"]
            + h @ params["w_hh"].T + params["b_hh"]
        )
        return h_new, None

    h0 = jnp.zeros((B, H), jnp.float32)
    h_last, _ = jax.lax.scan(step, h0, jnp.transpose(x, (1, 0, 2)))
    return h_last @ params["w_out"].T + params["b_out"]


if __name__ == "__main__":
    batch, seq, input_dim, hidden_dim, output_dim = 8, 8, 16, 32, 1

    key = jax.random.PRNGKey(0)
    k_x, k_p = jax.random.split(key)
    x = jax.random.normal(k_x, (batch, seq, input_dim), dtype=jnp.float32)
    params = init_params(k_p, input_dim, hidden_dim, output_dim)

    out = rnn_net_forward(x, params)
    out = jax.block_until_ready(out)

    ref = _reference_forward(x, params)
    assert out.shape == (batch, output_dim)
    assert jnp.allclose(out, ref, atol=2e-5, rtol=2e-5), "mismatch vs reference"

    print("KERNEL_OK")
</pallas_src>

<mosaic_0001>
module attributes {stable_mosaic.version = 11 : i64} {
  func.func @_rnn_kernel(%arg0: memref<64x16xf32, #tpu.memory_space<vmem>>, %arg1: memref<16x128xf32, #tpu.memory_space<vmem>>, %arg2: memref<128x128xf32, #tpu.memory_space<vmem>>, %arg3: memref<1x128xf32, #tpu.memory_space<vmem>>, %arg4: memref<128x128xf32, #tpu.memory_space<vmem>>, %arg5: memref<1x128xf32, #tpu.memory_space<vmem>>, %arg6: memref<8x128xf32, #tpu.memory_space<vmem>>) attributes {dimension_semantics = [], scalar_prefetch = 0 : i64, scratch_operands = 0 : i64, tpu.core_type = #tpu.core_type<tc>} {
    %c0 = arith.constant 0 : index
    %c0_0 = arith.constant 0 : index
    %0 = vector.load %arg0[%c0, %c0_0] : memref<64x16xf32, #tpu.memory_space<vmem>>, vector<64x16xf32>
    %c0_1 = arith.constant 0 : index
    %c0_2 = arith.constant 0 : index
    %1 = vector.load %arg1[%c0_1, %c0_2] : memref<16x128xf32, #tpu.memory_space<vmem>>, vector<16x128xf32>
    %cst = arith.constant dense<0.000000e+00> : vector<64x128xf32>
    %2 = tpu.matmul %0, %1, %cst {dimension_numbers = #tpu.dot_dimension_numbers<[1], [0], [0], [1], [0, 0, 1, 1], [], []>} : vector<64x16xf32>, vector<16x128xf32>, vector<64x128xf32> -> vector<64x128xf32>
    %c0_3 = arith.constant 0 : index
    %c0_4 = arith.constant 0 : index
    %3 = vector.load %arg3[%c0_3, %c0_4] : memref<1x128xf32, #tpu.memory_space<vmem>>, vector<1x128xf32>
    %4 = vector.broadcast %3 : vector<1x128xf32> to vector<64x128xf32>
    %5 = arith.addf %2, %4 : vector<64x128xf32>
    %cst_5 = arith.constant 0.000000e+00 : f32
    %6 = vector.broadcast %cst_5 : f32 to vector<8x128xf32>
    %7 = vector.extract_strided_slice %5 {offsets = [0, 0], sizes = [8, 128], strides = [1, 1]} : vector<64x128xf32> to vector<8x128xf32>
    %c0_6 = arith.constant 0 : index
    %c0_7 = arith.constant 0 : index
    %8 = vector.load %arg2[%c0_6, %c0_7] : memref<128x128xf32, #tpu.memory_space<vmem>>, vector<128x128xf32>
    %cst_8 = arith.constant dense<0.000000e+00> : vector<8x128xf32>
    %9 = tpu.matmul %6, %8, %cst_8 {dimension_numbers = #tpu.dot_dimension_numbers<[1], [0], [0], [1], [0, 0, 1, 1], [], []>} : vector<8x128xf32>, vector<128x128xf32>, vector<8x128xf32> -> vector<8x128xf32>
    %10 = arith.addf %7, %9 : vector<8x128xf32>
    %11 = math.tanh %10 : vector<8x128xf32>
    %12 = vector.extract_strided_slice %5 {offsets = [8, 0], sizes = [8, 128], strides = [1, 1]} : vector<64x128xf32> to vector<8x128xf32>
    %c0_9 = arith.constant 0 : index
    %c0_10 = arith.constant 0 : index
    %13 = vector.load %arg2[%c0_9, %c0_10] : memref<128x128xf32, #tpu.memory_space<vmem>>, vector<128x128xf32>
    %cst_11 = arith.constant dense<0.000000e+00> : vector<8x128xf32>
    %14 = tpu.matmul %11, %13, %cst_11 {dimension_numbers = #tpu.dot_dimension_numbers<[1], [0], [0], [1], [0, 0, 1, 1], [], []>} : vector<8x128xf32>, vector<128x128xf32>, vector<8x128xf32> -> vector<8x128xf32>
    %15 = arith.addf %12, %14 : vector<8x128xf32>
    %16 = math.tanh %15 : vector<8x128xf32>
    %17 = vector.extract_strided_slice %5 {offsets = [16, 0], sizes = [8, 128], strides = [1, 1]} : vector<64x128xf32> to vector<8x128xf32>
    %c0_12 = arith.constant 0 : index
    %c0_13 = arith.constant 0 : index
    %18 = vector.load %arg2[%c0_12, %c0_13] : memref<128x128xf32, #tpu.memory_space<vmem>>, vector<128x128xf32>
    %cst_14 = arith.constant dense<0.000000e+00> : vector<8x128xf32>
    %19 = tpu.matmul %16, %18, %cst_14 {dimension_numbers = #tpu.dot_dimension_numbers<[1], [0], [0], [1], [0, 0, 1, 1], [], []>} : vector<8x128xf32>, vector<128x128xf32>, vector<8x128xf32> -> vector<8x128xf32>
    %20 = arith.addf %17, %19 : vector<8x128xf32>
    %21 = math.tanh %20 : vector<8x128xf32>
    %22 = vector.extract_strided_slice %5 {offsets = [24, 0], sizes = [8, 128], strides = [1, 1]} : vector<64x128xf32> to vector<8x128xf32>
    %c0_15 = arith.constant 0 : index
    %c0_16 = arith.constant 0 : index
    %23 = vector.load %arg2[%c0_15, %c0_16] : memref<128x128xf32, #tpu.memory_space<vmem>>, vector<128x128xf32>
    %cst_17 = arith.constant dense<0.000000e+00> : vector<8x128xf32>
    %24 = tpu.matmul %21, %23, %cst_17 {dimension_numbers = #tpu.dot_dimension_numbers<[1], [0], [0], [1], [0, 0, 1, 1], [], []>} : vector<8x128xf32>, vector<128x128xf32>, vector<8x128xf32> -> vector<8x128xf32>
    %25 = arith.addf %22, %24 : vector<8x128xf32>
    %26 = math.tanh %25 : vector<8x128xf32>
    %27 = vector.extract_strided_slice %5 {offsets = [32, 0], sizes = [8, 128], strides = [1, 1]} : vector<64x128xf32> to vector<8x128xf32>
    %c0_18 = arith.constant 0 : index
    %c0_19 = arith.constant 0 : index
    %28 = vector.load %arg2[%c0_18, %c0_19] : memref<128x128xf32, #tpu.memory_space<vmem>>, vector<128x128xf32>
    %cst_20 = arith.constant dense<0.000000e+00> : vector<8x128xf32>
    %29 = tpu.matmul %26, %28, %cst_20 {dimension_numbers = #tpu.dot_dimension_numbers<[1], [0], [0], [1], [0, 0, 1, 1], [], []>} : vector<8x128xf32>, vector<128x128xf32>, vector<8x128xf32> -> vector<8x128xf32>
    %30 = arith.addf %27, %29 : vector<8x128xf32>
    %31 = math.tanh %30 : vector<8x128xf32>
    %32 = vector.extract_strided_slice %5 {offsets = [40, 0], sizes = [8, 128], strides = [1, 1]} : vector<64x128xf32> to vector<8x128xf32>
    %c0_21 = arith.constant 0 : index
    %c0_22 = arith.constant 0 : index
    %33 = vector.load %arg2[%c0_21, %c0_22] : memref<128x128xf32, #tpu.memory_space<vmem>>, vector<128x128xf32>
    %cst_23 = arith.constant dense<0.000000e+00> : vector<8x128xf32>
    %34 = tpu.matmul %31, %33, %cst_23 {dimension_numbers = #tpu.dot_dimension_numbers<[1], [0], [0], [1], [0, 0, 1, 1], [], []>} : vector<8x128xf32>, vector<128x128xf32>, vector<8x128xf32> -> vector<8x128xf32>
    %35 = arith.addf %32, %34 : vector<8x128xf32>
    %36 = math.tanh %35 : vector<8x128xf32>
    %37 = vector.extract_strided_slice %5 {offsets = [48, 0], sizes = [8, 128], strides = [1, 1]} : vector<64x128xf32> to vector<8x128xf32>
    %c0_24 = arith.constant 0 : index
    %c0_25 = arith.constant 0 : index
    %38 = vector.load %arg2[%c0_24, %c0_25] : memref<128x128xf32, #tpu.memory_space<vmem>>, vector<128x128xf32>
    %cst_26 = arith.constant dense<0.000000e+00> : vector<8x128xf32>
    %39 = tpu.matmul %36, %38, %cst_26 {dimension_numbers = #tpu.dot_dimension_numbers<[1], [0], [0], [1], [0, 0, 1, 1], [], []>} : vector<8x128xf32>, vector<128x128xf32>, vector<8x128xf32> -> vector<8x128xf32>
    %40 = arith.addf %37, %39 : vector<8x128xf32>
    %41 = math.tanh %40 : vector<8x128xf32>
    %42 = vector.extract_strided_slice %5 {offsets = [56, 0], sizes = [8, 128], strides = [1, 1]} : vector<64x128xf32> to vector<8x128xf32>
    %c0_27 = arith.constant 0 : index
    %c0_28 = arith.constant 0 : index
    %43 = vector.load %arg2[%c0_27, %c0_28] : memref<128x128xf32, #tpu.memory_space<vmem>>, vector<128x128xf32>
    %cst_29 = arith.constant dense<0.000000e+00> : vector<8x128xf32>
    %44 = tpu.matmul %41, %43, %cst_29 {dimension_numbers = #tpu.dot_dimension_numbers<[1], [0], [0], [1], [0, 0, 1, 1], [], []>} : vector<8x128xf32>, vector<128x128xf32>, vector<8x128xf32> -> vector<8x128xf32>
    %45 = arith.addf %42, %44 : vector<8x128xf32>
    %46 = math.tanh %45 : vector<8x128xf32>
    %c0_30 = arith.constant 0 : index
    %c0_31 = arith.constant 0 : index
    %47 = vector.load %arg4[%c0_30, %c0_31] : memref<128x128xf32, #tpu.memory_space<vmem>>, vector<128x128xf32>
    %cst_32 = arith.constant dense<0.000000e+00> : vector<8x128xf32>
    %48 = tpu.matmul %46, %47, %cst_32 {dimension_numbers = #tpu.dot_dimension_numbers<[1], [0], [0], [1], [0, 0, 1, 1], [], []>} : vector<8x128xf32>, vector<128x128xf32>, vector<8x128xf32> -> vector<8x128xf32>
    %c0_33 = arith.constant 0 : index
    %c0_34 = arith.constant 0 : index
    %49 = vector.load %arg5[%c0_33, %c0_34] : memref<1x128xf32, #tpu.memory_space<vmem>>, vector<1x128xf32>
    %50 = vector.broadcast %49 : vector<1x128xf32> to vector<8x128xf32>
    %51 = arith.addf %48, %50 : vector<8x128xf32>
    %c0_35 = arith.constant 0 : index
    %c0_36 = arith.constant 0 : index
    %52 = vector.load %arg6[%c0_35, %c0_36] : memref<8x128xf32, #tpu.memory_space<vmem>>, vector<8x128xf32>
    tpu.vector_store %arg6[%c0_35, %c0_36], %51 {strides = array<i32>} : memref<8x128xf32, #tpu.memory_space<vmem>>, vector<8x128xf32>,
    return
  }
}

</mosaic_0001>

<llo_original>
// kernel: tpu_custom_call.1
$region0: #{tpu_custom_call.1}
  #allocation0 [shape = 'u32[]', space=smem, size = 0x4, offset = 0x4, fixed_abs, tag = 'smem constant byte address 0x4 - core index']
  #allocation1 [shape = 'u32[144,128]{1,0:T(1,128)}', space=vmem, size = 0x12000, scoped, tag = 'internal scratch']
  %s0 = inlined_call_operand.vmem [shape: f32[64,16], index: 0, kind: input, shape index: {}]
  %s1 = inlined_call_operand.vmem [shape: f32[16,128], index: 1, kind: input, shape index: {}]
  %s2 = inlined_call_operand.hbm [shape: f32[128,128], index: 2, kind: input, shape index: {}]
  %s3 = inlined_call_operand.vmem [shape: f32[1,128], index: 3, kind: input, shape index: {}]
  %s4 = inlined_call_operand.hbm [shape: f32[128,128], index: 4, kind: input, shape index: {}]
  %s5 = inlined_call_operand.vmem [shape: f32[1,128], index: 5, kind: input, shape index: {}]
  %s6 = inlined_call_operand.hbm [shape: f32[8,128], index: 6, kind: output, shape index: {}]
  %s7 = sld [smem:[#allocation0]]
  $region42: #{tpu_custom_call.1} parent=0
    _
  %s9 = ssub.s32 1, %s7
  %s10 = scalar_select 0, %s9, %s7
  $region1: #{tpu_custom_call.1} parent=0
    #allocation2 [shape = 'u8[65536]{0}', space=vmem, size = 0x10000, scoped, tag = 'input window, operand 2, single buffered']
    #allocation3 [shape = 's32[1]{0}', space=sflag, size = 0x4, scoped, tag = 'scoped memory for tpu_custom_call.1']
    #allocation4 [shape = 's32[1]{0}', space=sflag, size = 0x4, scoped, tag = 'scoped memory for tpu_custom_call.1']
    #allocation5 [shape = 'u8[65536]{0}', space=vmem, size = 0x10000, scoped, tag = 'input window, operand 4, single buffered']
    #allocation6 [shape = 's32[1]{0}', space=sflag, size = 0x4, scoped, tag = 'scoped memory for tpu_custom_call.1']
    #allocation7 [shape = 'u8[4096]{0}', space=vmem, size = 0x1000, scoped, tag = 'output window, operand 0, single buffered']
    %11 = vsyncpa [#allocation3], 0
    %12 = vsyncpa [#allocation6], 0
    %13 = vsyncpa [#allocation4], 0
    // Predicated region
    $region2: #{tpu_custom_call.1} parent=1 // pred_check
      _
    $region3: #{tpu_custom_call.1} parent=1 // pred_check_branch
      %15 = sbr.rel (0) target = $region5
    $region4: #{tpu_custom_call.1} parent=1 // pred_region
      _
    $region5: #{tpu_custom_call.1} parent=1 // pred_fallthru
      _
    // Predicated region
    $region6: #{tpu_custom_call.1} parent=1 // pred_check
      _
    $region7: #{tpu_custom_call.1} parent=1 // pred_check_branch
      %17 = sbr.rel (0) target = $region9
    $region8: #{tpu_custom_call.1} parent=1 // pred_region
      _
    $region9: #{tpu_custom_call.1} parent=1 // pred_fallthru
      _
    // Predicated region
    $region10: #{tpu_custom_call.1} parent=1 // pred_check
      _
    $region11: #{tpu_custom_call.1} parent=1 // pred_check_branch
      %19 = sbr.rel (0) target = $region13
    $region12: #{tpu_custom_call.1} parent=1 // pred_region
      %s21 = ssub.s32 2048, 2048
      %22 = vsyncadd [#allocation3], %s21
      %s23 = sshll.u32 [#allocation2], 4
      %s24 = int_to_ptr.vmem [resolvable:$true] %s23
      %29 = dma.hbm_to_vmem [thread:$0]  %s2, 2048, %s24, [#allocation3], 128, 128, 8
    $region13: #{tpu_custom_call.1} parent=1 // pred_fallthru
      _
    // Predicated region
    $region14: #{tpu_custom_call.1} parent=1 // pred_check
      _
    $region15: #{tpu_custom_call.1} parent=1 // pred_check_branch
      %31 = sbr.rel (0) target = $region17
    $region16: #{tpu_custom_call.1} parent=1 // pred_region
      _
    $region17: #{tpu_custom_call.1} parent=1 // pred_fallthru
      _
    // Predicated region
    $region18: #{tpu_custom_call.1} parent=1 // pred_check
      _
    $region19: #{tpu_custom_call.1} parent=1 // pred_check_branch
      %33 = sbr.rel (0) target = $region21
    $region20: #{tpu_custom_call.1} parent=1 // pred_region
      %s35 = ssub.s32 2048, 2048
      %36 = vsyncadd [#allocation6], %s35
      %s37 = sshll.u32 [#allocation5], 4
      %s38 = int_to_ptr.vmem [resolvable:$true] %s37
      %43 = dma.hbm_to_vmem [thread:$0]  %s4, 2048, %s38, [#allocation6], 128, 128, 8
    $region21: #{tpu_custom_call.1} parent=1 // pred_fallthru
      _
    // Predicated region
    $region22: #{tpu_custom_call.1} parent=1 // pred_check
      _
    $region23: #{tpu_custom_call.1} parent=1 // pred_check_branch
      %45 = sbr.rel (0) target = $region25
    $region24: #{tpu_custom_call.1} parent=1 // pred_region
      _
    $region25: #{tpu_custom_call.1} parent=1 // pred_fallthru
      _
    // Predicated region
    $region26: #{tpu_custom_call.1} parent=1 // pred_check
      _
    $region27: #{tpu_custom_call.1} parent=1 // pred_check_branch
      %47 = sbr.rel (0) target = $region29
    $region28: #{tpu_custom_call.1} parent=1 // pred_region
      %48 = dma.done [#allocation3], 2048
    $region29: #{tpu_custom_call.1} parent=1 // pred_fallthru
      _
    // Predicated region
    $region30: #{tpu_custom_call.1} parent=1 // pred_check
      _
    $region31: #{tpu_custom_call.1} parent=1 // pred_check_branch
      %50 = sbr.rel (0) target = $region33
    $region32: #{tpu_custom_call.1} parent=1 // pred_region
      %51 = dma.done [#allocation6], 2048
    $region33: #{tpu_custom_call.1} parent=1 // pred_fallthru
      _
    %v52 = vld [vmem:[%s0] sm:$0xff]
    %v53 = vld [vmem:[%s0 + $0x8] sm:$0xff]
    %v54 = vld [vmem:[%s0 + $0x10] sm:$0xff]
    %v55 = vld [vmem:[%s0 + $0x18] sm:$0xff]
    %v56 = vld [vmem:[%s0 + $0x20] sm:$0xff]
    %v57 = vld [vmem:[%s0 + $0x28] sm:$0xff]
    %v58 = vld [vmem:[%s0 + $0x30] sm:$0xff]
    %v59 = vld [vmem:[%s0 + $0x38] sm:$0xff]
    %v60 = vld [vmem:[%s1] sm:$0xff]
    %v61 = vld [vmem:[%s1 + $0x8] sm:$0xff]
    %v62 = vld [vmem:[%s3] sm:$0x1]
    %v64 = vlaneseq
    %v65 = vshrl.u32 %v64, 7
    %v66 = vsub.s32 0, %v65
    %v67 = vrot.slane %v62, %v66
    %vm69 = vcmask 130048
    %v71 = vsel %vm69, %v52, 0
    %v74 = vsel %vm69, %v53, 0
    %v77 = vsel %vm69, %v54, 0
    %v80 = vsel %vm69, %v55, 0
    %v83 = vsel %vm69, %v56, 0
    %v86 = vsel %vm69, %v57, 0
    %v89 = vsel %vm69, %v58, 0
    %v92 = vsel %vm69, %v59, 0
    %94 = vmatprep.subr.mxu0 0.0
    %95 = vmatpush1.msra.mxu0 0.0
    %96 = vmatprep.subr.mxu0 0.0
    %97 = vmatpush1.msra.mxu0 0.0
    %98 = vmatprep.subr.mxu0 0.0
    %99 = vmatpush1.msra.mxu0 0.0
    %100 = vmatprep.subr.mxu0 0.0
    %101 = vmatpush1.msra.mxu0 0.0
    %102 = vmatprep.subr.mxu0 0.0
    %103 = vmatpush1.msra.mxu0 0.0
    %104 = vmatprep.subr.mxu0 0.0
    %105 = vmatpush1.msra.mxu0 0.0
    %106 = vmatprep.subr.mxu0 0.0
    %107 = vmatpush1.msra.mxu0 0.0
    %108 = vmatprep.subr.mxu0 0.0
    %109 = vmatpush1.msra.mxu0 0.0
    %110 = vmatprep.subr.mxu0 0.0
    %111 = vmatpush1.msra.mxu0 0.0
    %112 = vmatprep.subr.mxu0 0.0
    %113 = vmatpush1.msra.mxu0 0.0
    %114 = vmatprep.subr.mxu0 0.0
    %115 = vmatpush1.msra.mxu0 0.0
    %116 = vmatprep.subr.mxu0 0.0
    %117 = vmatpush1.msra.mxu0 0.0
    %118 = vmatprep.subr.mxu0 0.0
    %119 = vmatpush1.msra.mxu0 0.0
    %120 = vmatprep.subr.mxu0 0.0
    %121 = vmatpush1.msra.mxu0 0.0
    %122 = vmatprep.subr.mxu0 0.0
    %123 = vmatpush1.msra.mxu0 %v61
    %124 = vmatprep.subr.mxu0 0.0
    %125 = vmatpush1.msra.mxu0 %v60
    %126 = vmatprep.subr.mxu0 0.0
    %127 = vmatpush2.msra.mxu0 0.0
    %128 = vmatprep.subr.mxu0 0.0
    %129 = vmatpush2.msra.mxu0 0.0
    %130 = vmatprep.subr.mxu0 0.0
    %131 = vmatpush2.msra.mxu0 0.0
    %132 = vmatprep.subr.mxu0 0.0
    %133 = vmatpush2.msra.mxu0 0.0
    %134 = vmatprep.subr.mxu0 0.0
    %135 = vmatpush2.msra.mxu0 0.0
    %136 = vmatprep.subr.mxu0 0.0
    %137 = vmatpush2.msra.mxu0 0.0
    %138 = vmatprep.subr.mxu0 0.0
    %139 = vmatpush2.msra.mxu0 0.0
    %140 = vmatprep.subr.mxu0 0.0
    %141 = vmatpush2.msra.mxu0 0.0
    %142 = vmatprep.subr.mxu0 0.0
    %143 = vmatpush2.msra.mxu0 0.0
    %144 = vmatprep.subr.mxu0 0.0
    %145 = vmatpush2.msra.mxu0 0.0
    %146 = vmatprep.subr.mxu0 0.0
    %147 = vmatpush2.msra.mxu0 0.0
    %148 = vmatprep.subr.mxu0 0.0
    %149 = vmatpush2.msra.mxu0 0.0
    %150 = vmatprep.subr.mxu0 0.0
    %151 = vmatpush2.msra.mxu0 0.0
    %152 = vmatprep.subr.mxu0 0.0
    %153 = vmatpush2.msra.mxu0 0.0
    %154 = vmatprep.subr.mxu0 0.0
    %155 = vmatpush2.msra.mxu0 0.0
    %156 = vmatprep.subr.mxu0 0.0
    %157 = vmatpush2.msra.mxu0 0.0
    %158 = vmatprep.mubr.f32.mxu0 0.0
    %159 = vmatmul.mubr.f32.gmra.mxu0 %v71
    %v160 = vpop.f32.mrf.mxu0
    %v161 = vadd.f32 %v67, %v160
    %v162 = vpop.f32.mrf.mxu0
    %163 = vmatprep.mubr.f32.mxu0 0.0
    %164 = vmatmul.mubr.f32.gmra.mxu0 %v74
    %v165 = vpop.f32.mrf.mxu0
    %v166 = vadd.f32 %v67, %v165
    %v167 = vpop.f32.mrf.mxu0
    %168 = vmatprep.mubr.f32.mxu0 0.0
    %169 = vmatmul.mubr.f32.gmra.mxu0 %v77
    %v170 = vpop.f32.mrf.mxu0
    %v171 = vadd.f32 %v67, %v170
    %v172 = vpop.f32.mrf.mxu0
    %173 = vmatprep.mubr.f32.mxu0 0.0
    %174 = vmatmul.mubr.f32.gmra.mxu0 %v80
    %v175 = vpop.f32.mrf.mxu0
    %v176 = vadd.f32 %v67, %v175
    %v177 = vpop.f32.mrf.mxu0
    %178 = vmatprep.mubr.f32.mxu0 0.0
    %179 = vmatmul.mubr.f32.gmra.mxu0 %v83
    %v180 = vpop.f32.mrf.mxu0
    %v181 = vadd.f32 %v67, %v180
    %v182 = vpop.f32.mrf.mxu0
    %183 = vmatprep.mubr.f32.mxu0 0.0
    %184 = vmatmul.mubr.f32.gmra.mxu0 %v86
    %v185 = vpop.f32.mrf.mxu0
    %v186 = vadd.f32 %v67, %v185
    %v187 = vpop.f32.mrf.mxu0
    %188 = vmatprep.mubr.f32.mxu0 0.0
    %189 = vmatmul.mubr.f32.gmra.mxu0 %v89
    %v190 = vpop.f32.mrf.mxu0
    %v191 = vadd.f32 %v67, %v190
    %v192 = vpop.f32.mrf.mxu0
    %193 = vmatprep.mubr.f32.mxu0 0.0
    %194 = vmatmul.mubr.f32.gmra.mxu0 %v92
    %v195 = vpop.f32.mrf.mxu0
    %v196 = vadd.f32 %v67, %v195
    %v197 = vpop.f32.mrf.mxu0
    %198 = vdwg.mxu0
    %v199 = vld [vmem:[#allocation2] sm:$0xff]
    %v200 = vld [vmem:[#allocation2 + $0x8] sm:$0xff]
    %v201 = vld [vmem:[#allocation2 + $0x10] sm:$0xff]
    %v202 = vld [vmem:[#allocation2 + $0x18] sm:$0xff]
    %v203 = vld [vmem:[#allocation2 + $0x20] sm:$0xff]
    %v204 = vld [vmem:[#allocation2 + $0x28] sm:$0xff]
    %v205 = vld [vmem:[#allocation2 + $0x30] sm:$0xff]
    %v206 = vld [vmem:[#allocation2 + $0x38] sm:$0xff]
    %v207 = vld [vmem:[#allocation2 + $0x40] sm:$0xff]
    %v208 = vld [vmem:[#allocation2 + $0x48] sm:$0xff]
    %v209 = vld [vmem:[#allocation2 + $0x50] sm:$0xff]
    %v210 = vld [vmem:[#allocation2 + $0x58] sm:$0xff]
    %v211 = vld [vmem:[#allocation2 + $0x60] sm:$0xff]
    %v212 = vld [vmem:[#allocation2 + $0x68] sm:$0xff]
    %v213 = vld [vmem:[#allocation2 + $0x70] sm:$0xff]
    %v214 = vld [vmem:[#allocation2 + $0x78] sm:$0xff]
    %215 = vmatprep.subr.mxu0 0.0
    %216 = vmatpush1.msra.mxu0 %v214
    %217 = vmatprep.subr.mxu0 0.0
    %218 = vmatpush1.msra.mxu0 %v213
    %219 = vmatprep.subr.mxu0 0.0
    %220 = vmatpush1.msra.mxu0 %v212
    %221 = vmatprep.subr.mxu0 0.0
    %222 = vmatpush1.msra.mxu0 %v211
    %223 = vmatprep.subr.mxu0 0.0
    %224 = vmatpush1.msra.mxu0 %v210
    %225 = vmatprep.subr.mxu0 0.0
    %226 = vmatpush1.msra.mxu0 %v209
    %227 = vmatprep.subr.mxu0 0.0
    %228 = vmatpush1.msra.mxu0 %v208
    %229 = vmatprep.subr.mxu0 0.0
    %230 = vmatpush1.msra.mxu0 %v207
    %231 = vmatprep.subr.mxu0 0.0
    %232 = vmatpush1.msra.mxu0 %v206
    %233 = vmatprep.subr.mxu0 0.0
    %234 = vmatpush1.msra.mxu0 %v205
    %235 = vmatprep.subr.mxu0 0.0
    %236 = vmatpush1.msra.mxu0 %v204
    %237 = vmatprep.subr.mxu0 0.0
    %238 = vmatpush1.msra.mxu0 %v203
    %239 = vmatprep.subr.mxu0 0.0
    %240 = vmatpush1.msra.mxu0 %v202
    %241 = vmatprep.subr.mxu0 0.0
    %242 = vmatpush1.msra.mxu0 %v201
    %243 = vmatprep.subr.mxu0 0.0
    %244 = vmatpush1.msra.mxu0 %v200
    %245 = vmatprep.subr.mxu0 0.0
    %246 = vmatpush1.msra.mxu0 %v199
    %247 = vmatprep.subr.mxu0 0.0
    %248 = vmatpush2.msra.mxu0 0.0
    %249 = vmatprep.subr.mxu0 0.0
    %250 = vmatpush2.msra.mxu0 0.0
    %251 = vmatprep.subr.mxu0 0.0
    %252 = vmatpush2.msra.mxu0 0.0
    %253 = vmatprep.subr.mxu0 0.0
    %254 = vmatpush2.msra.mxu0 0.0
    %255 = vmatprep.subr.mxu0 0.0
    %256 = vmatpush2.msra.mxu0 0.0
    %257 = vmatprep.subr.mxu0 0.0
    %258 = vmatpush2.msra.mxu0 0.0
    %259 = vmatprep.subr.mxu0 0.0
    %260 = vmatpush2.msra.mxu0 0.0
    %261 = vmatprep.subr.mxu0 0.0
    %262 = vmatpush2.msra.mxu0 0.0
    %263 = vmatprep.subr.mxu0 0.0
    %264 = vmatpush2.msra.mxu0 0.0
    %265 = vmatprep.subr.mxu0 0.0
    %266 = vmatpush2.msra.mxu0 0.0
    %267 = vmatprep.subr.mxu0 0.0
    %268 = vmatpush2.msra.mxu0 0.0
    %269 = vmatprep.subr.mxu0 0.0
    %270 = vmatpush2.msra.mxu0 0.0
    %271 = vmatprep.subr.mxu0 0.0
    %272 = vmatpush2.msra.mxu0 0.0
    %273 = vmatprep.subr.mxu0 0.0
    %274 = vmatpush2.msra.mxu0 0.0
    %275 = vmatprep.subr.mxu0 0.0
    %276 = vmatpush2.msra.mxu0 0.0
    %277 = vmatprep.subr.mxu0 0.0
    %278 = vmatpush2.msra.mxu0 0.0
    %279 = vmatprep.mubr.f32.mxu0 0.0
    %280 = vmatmul.mubr.f32.gmra.mxu0 0.0
    %v281 = vpop.f32.mrf.mxu0
    %v282 = vadd.f32 0.0, %v281
    %v283 = vpop.f32.mrf.mxu0
    %284 = vdwg.mxu0
    %v285 = vadd.f32 %v161, %v282
    %v286 = vtanh.pop %v285
    %287 = vmatprep.subr.mxu0 0.0
    %288 = vmatpush1.msra.mxu0 %v214
    %289 = vmatprep.subr.mxu0 0.0
    %290 = vmatpush1.msra.mxu0 %v213
    %291 = vmatprep.subr.mxu0 0.0
    %292 = vmatpush1.msra.mxu0 %v212
    %293 = vmatprep.subr.mxu0 0.0
    %294 = vmatpush1.msra.mxu0 %v211
    %295 = vmatprep.subr.mxu0 0.0
    %296 = vmatpush1.msra.mxu0 %v210
    %297 = vmatprep.subr.mxu0 0.0
    %298 = vmatpush1.msra.mxu0 %v209
    %299 = vmatprep.subr.mxu0 0.0
    %300 = vmatpush1.msra.mxu0 %v208
    %301 = vmatprep.subr.mxu0 0.0
    %302 = vmatpush1.msra.mxu0 %v207
    %303 = vmatprep.subr.mxu0 0.0
    %304 = vmatpush1.msra.mxu0 %v206
    %305 = vmatprep.subr.mxu0 0.0
    %306 = vmatpush1.msra.mxu0 %v205
    %307 = vmatprep.subr.mxu0 0.0
    %308 = vmatpush1.msra.mxu0 %v204
    %309 = vmatprep.subr.mxu0 0.0
    %310 = vmatpush1.msra.mxu0 %v203
    %311 = vmatprep.subr.mxu0 0.0
    %312 = vmatpush1.msra.mxu0 %v202
    %313 = vmatprep.subr.mxu0 0.0
    %314 = vmatpush1.msra.mxu0 %v201
    %315 = vmatprep.subr.mxu0 0.0
    %316 = vmatpush1.msra.mxu0 %v200
    %317 = vmatprep.subr.mxu0 0.0
    %318 = vmatpush1.msra.mxu0 %v199
    %319 = vmatprep.subr.mxu0 0.0
    %320 = vmatpush2.msra.mxu0 0.0
    %321 = vmatprep.subr.mxu0 0.0
    %322 = vmatpush2.msra.mxu0 0.0
    %323 = vmatprep.subr.mxu0 0.0
    %324 = vmatpush2.msra.mxu0 0.0
    %325 = vmatprep.subr.mxu0 0.0
    %326 = vmatpush2.msra.mxu0 0.0
    %327 = vmatprep.subr.mxu0 0.0
    %328 = vmatpush2.msra.mxu0 0.0
    %329 = vmatprep.subr.mxu0 0.0
    %330 = vmatpush2.msra.mxu0 0.0
    %331 = vmatprep.subr.mxu0 0.0
    %332 = vmatpush2.msra.mxu0 0.0
    %333 = vmatprep.subr.mxu0 0.0
    %334 = vmatpush2.msra.mxu0 0.0
    %335 = vmatprep.subr.mxu0 0.0
    %336 = vmatpush2.msra.mxu0 0.0
    %337 = vmatprep.subr.mxu0 0.0
    %338 = vmatpush2.msra.mxu0 0.0
    %339 = vmatprep.subr.mxu0 0.0
    %340 = vmatpush2.msra.mxu0 0.0
    %341 = vmatprep.subr.mxu0 0.0
    %342 = vmatpush2.msra.mxu0 0.0
    %343 = vmatprep.subr.mxu0 0.0
    %344 = vmatpush2.msra.mxu0 0.0
    %345 = vmatprep.subr.mxu0 0.0
    %346 = vmatpush2.msra.mxu0 0.0
    %347 = vmatprep.subr.mxu0 0.0
    %348 = vmatpush2.msra.mxu0 0.0
    %349 = vmatprep.subr.mxu0 0.0
    %350 = vmatpush2.msra.mxu0 0.0
    %351 = vmatprep.mubr.f32.mxu0 0.0
    %352 = vmatmul.mubr.f32.gmra.mxu0 %v286
    %v353 = vpop.f32.mrf.mxu0
    %v354 = vadd.f32 0.0, %v353
    %v355 = vpop.f32.mrf.mxu0
    %356 = vdwg.mxu0
    %v357 = vadd.f32 %v166, %v354
    %v358 = vtanh.pop %v357
    %359 = vmatprep.subr.mxu0 0.0
    %360 = vmatpush1.msra.mxu0 %v214
    %361 = vmatprep.subr.mxu0 0.0
    %362 = vmatpush1.msra.mxu0 %v213
    %363 = vmatprep.subr.mxu0 0.0
    %364 = vmatpush1.msra.mxu0 %v212
    %365 = vmatprep.subr.mxu0 0.0
    %366 = vmatpush1.msra.mxu0 %v211
    %367 = vmatprep.subr.mxu0 0.0
    %368 = vmatpush1.msra.mxu0 %v210
    %369 = vmatprep.subr.mxu0 0.0
    %370 = vmatpush1.msra.mxu0 %v209
    %371 = vmatprep.subr.mxu0 0.0
    %372 = vmatpush1.msra.mxu0 %v208
    %373 = vmatprep.subr.mxu0 0.0
    %374 = vmatpush1.msra.mxu0 %v207
    %375 = vmatprep.subr.mxu0 0.0
    %376 = vmatpush1.msra.mxu0 %v206
    %377 = vmatprep.subr.mxu0 0.0
    %378 = vmatpush1.msra.mxu0 %v205
    %379 = vmatprep.subr.mxu0 0.0
    %380 = vmatpush1.msra.mxu0 %v204
    %381 = vmatprep.subr.mxu0 0.0
    %382 = vmatpush1.msra.mxu0 %v203
    %383 = vmatprep.subr.mxu0 0.0
    %384 = vmatpush1.msra.mxu0 %v202
    %385 = vmatprep.subr.mxu0 0.0
    %386 = vmatpush1.msra.mxu0 %v201
    %387 = vmatprep.subr.mxu0 0.0
    %388 = vmatpush1.msra.mxu0 %v200
    %389 = vmatprep.subr.mxu0 0.0
    %390 = vmatpush1.msra.mxu0 %v199
    %391 = vmatprep.subr.mxu0 0.0
    %392 = vmatpush2.msra.mxu0 0.0
    %393 = vmatprep.subr.mxu0 0.0
    %394 = vmatpush2.msra.mxu0 0.0
    %395 = vmatprep.subr.mxu0 0.0
    %396 = vmatpush2.msra.mxu0 0.0
    %397 = vmatprep.subr.mxu0 0.0
    %398 = vmatpush2.msra.mxu0 0.0
    %399 = vmatprep.subr.mxu0 0.0
    %400 = vmatpush2.msra.mxu0 0.0
    %401 = vmatprep.subr.mxu0 0.0
    %402 = vmatpush2.msra.mxu0 0.0
    %403 = vmatprep.subr.mxu0 0.0
    %404 = vmatpush2.msra.mxu0 0.0
    %405 = vmatprep.subr.mxu0 0.0
    %406 = vmatpush2.msra.mxu0 0.0
    %407 = vmatprep.subr.mxu0 0.0
    %408 = vmatpush2.msra.mxu0 0.0
    %409 = vmatprep.subr.mxu0 0.0
    %410 = vmatpush2.msra.mxu0 0.0
    %411 = vmatprep.subr.mxu0 0.0
    %412 = vmatpush2.msra.mxu0 0.0
    %413 = vmatprep.subr.mxu0 0.0
    %414 = vmatpush2.msra.mxu0 0.0
    %415 = vmatprep.subr.mxu0 0.0
    %416 = vmatpush2.msra.mxu0 0.0
    %417 = vmatprep.subr.mxu0 0.0
    %418 = vmatpush2.msra.mxu0 0.0
    %419 = vmatprep.subr.mxu0 0.0
    %420 = vmatpush2.msra.mxu0 0.0
    %421 = vmatprep.subr.mxu0 0.0
    %422 = vmatpush2.msra.mxu0 0.0
    %423 = vmatprep.mubr.f32.mxu0 0.0
    %424 = vmatmul.mubr.f32.gmra.mxu0 %v358
    %v425 = vpop.f32.mrf.mxu0
    %v426 = vadd.f32 0.0, %v425
    %v427 = vpop.f32.mrf.mxu0
    %428 = vdwg.mxu0
    %v429 = vadd.f32 %v171, %v426
    %v430 = vtanh.pop %v429
    %431 = vmatprep.subr.mxu0 0.0
    %432 = vmatpush1.msra.mxu0 %v214
    %433 = vmatprep.subr.mxu0 0.0
    %434 = vmatpush1.msra.mxu0 %v213
    %435 = vmatprep.subr.mxu0 0.0
    %436 = vmatpush1.msra.mxu0 %v212
    %437 = vmatprep.subr.mxu0 0.0
    %438 = vmatpush1.msra.mxu0 %v211
    %439 = vmatprep.subr.mxu0 0.0
    %440 = vmatpush1.msra.mxu0 %v210
    %441 = vmatprep.subr.mxu0 0.0
    %442 = vmatpush1.msra.mxu0 %v209
    %443 = vmatprep.subr.mxu0 0.0
    %444 = vmatpush1.msra.mxu0 %v208
    %445 = vmatprep.subr.mxu0 0.0
    %446 = vmatpush1.msra.mxu0 %v207
    %447 = vmatprep.subr.mxu0 0.0
    %448 = vmatpush1.msra.mxu0 %v206
    %449 = vmatprep.subr.mxu0 0.0
    %450 = vmatpush1.msra.mxu0 %v205
    %451 = vmatprep.subr.mxu0 0.0
    %452 = vmatpush1.msra.mxu0 %v204
    %453 = vmatprep.subr.mxu0 0.0
    %454 = vmatpush1.msra.mxu0 %v203
    %455 = vmatprep.subr.mxu0 0.0
    %456 = vmatpush1.msra.mxu0 %v202
    %457 = vmatprep.subr.mxu0 0.0
    %458 = vmatpush1.msra.mxu0 %v201
    %459 = vmatprep.subr.mxu0 0.0
    %460 = vmatpush1.msra.mxu0 %v200
    %461 = vmatprep.subr.mxu0 0.0
    %462 = vmatpush1.msra.mxu0 %v199
    %463 = vmatprep.subr.mxu0 0.0
    %464 = vmatpush2.msra.mxu0 0.0
    %465 = vmatprep.subr.mxu0 0.0
    %466 = vmatpush2.msra.mxu0 0.0
    %467 = vmatprep.subr.mxu0 0.0
    %468 = vmatpush2.msra.mxu0 0.0
    %469 = vmatprep.subr.mxu0 0.0
    %470 = vmatpush2.msra.mxu0 0.0
    %471 = vmatprep.subr.mxu0 0.0
    %472 = vmatpush2.msra.mxu0 0.0
    %473 = vmatprep.subr.mxu0 0.0
    %474 = vmatpush2.msra.mxu0 0.0
    %475 = vmatprep.subr.mxu0 0.0
    %476 = vmatpush2.msra.mxu0 0.0
    %477 = vmatprep.subr.mxu0 0.0
    %478 = vmatpush2.msra.mxu0 0.0
    %479 = vmatprep.subr.mxu0 0.0
    %480 = vmatpush2.msra.mxu0 0.0
    %481 = vmatprep.subr.mxu0 0.0
    %482 = vmatpush2.msra.mxu0 0.0
    %483 = vmatprep.subr.mxu0 0.0
    %484 = vmatpush2.msra.mxu0 0.0
    %485 = vmatprep.subr.mxu0 0.0
    %486 = vmatpush2.msra.mxu0 0.0
    %487 = vmatprep.subr.mxu0 0.0
    %488 = vmatpush2.msra.mxu0 0.0
    %489 = vmatprep.subr.mxu0 0.0
    %490 = vmatpush2.msra.mxu0 0.0
    %491 = vmatprep.subr.mxu0 0.0
    %492 = vmatpush2.msra.mxu0 0.0
    %493 = vmatprep.subr.mxu0 0.0
    %494 = vmatpush2.msra.mxu0 0.0
    %495 = vmatprep.mubr.f32.mxu0 0.0
    %496 = vmatmul.mubr.f32.gmra.mxu0 %v430
    %v497 = vpop.f32.mrf.mxu0
    %v498 = vadd.f32 0.0, %v497
    %v499 = vpop.f32.mrf.mxu0
    %500 = vdwg.mxu0
    %v501 = vadd.f32 %v176, %v498
    %v502 = vtanh.pop %v501
    %503 = vmatprep.subr.mxu0 0.0
    %504 = vmatpush1.msra.mxu0 %v214
    %505 = vmatprep.subr.mxu0 0.0
    %506 = vmatpush1.msra.mxu0 %v213
    %507 = vmatprep.subr.mxu0 0.0
    %508 = vmatpush1.msra.mxu0 %v212
    %509 = vmatprep.subr.mxu0 0.0
    %510 = vmatpush1.msra.mxu0 %v211
    %511 = vmatprep.subr.mxu0 0.0
    %512 = vmatpush1.msra.mxu0 %v210
    %513 = vmatprep.subr.mxu0 0.0
    %514 = vmatpush1.msra.mxu0 %v209
    %515 = vmatprep.subr.mxu0 0.0
    %516 = vmatpush1.msra.mxu0 %v208
    %517 = vmatprep.subr.mxu0 0.0
    %518 = vmatpush1.msra.mxu0 %v207
    %519 = vmatprep.subr.mxu0 0.0
    %520 = vmatpush1.msra.mxu0 %v206
    %521 = vmatprep.subr.mxu0 0.0
    %522 = vmatpush1.msra.mxu0 %v205
    %523 = vmatprep.subr.mxu0 0.0
    %524 = vmatpush1.msra.mxu0 %v204
    %525 = vmatprep.subr.mxu0 0.0
    %526 = vmatpush1.msra.mxu0 %v203
    %527 = vmatprep.subr.mxu0 0.0
    %528 = vmatpush1.msra.mxu0 %v202
    %529 = vmatprep.subr.mxu0 0.0
    %530 = vmatpush1.msra.mxu0 %v201
    %531 = vmatprep.subr.mxu0 0.0
    %532 = vmatpush1.msra.mxu0 %v200
    %533 = vmatprep.subr.mxu0 0.0
    %534 = vmatpush1.msra.mxu0 %v199
    %535 = vmatprep.subr.mxu0 0.0
    %536 = vmatpush2.msra.mxu0 0.0
    %537 = vmatprep.subr.mxu0 0.0
    %538 = vmatpush2.msra.mxu0 0.0
    %539 = vmatprep.subr.mxu0 0.0
    %540 = vmatpush2.msra.mxu0 0.0
    %541 = vmatprep.subr.mxu0 0.0
    %542 = vmatpush2.msra.mxu0 0.0
    %543 = vmatprep.subr.mxu0 0.0
    %544 = vmatpush2.msra.mxu0 0.0
    %545 = vmatprep.subr.mxu0 0.0
    %546 = vmatpush2.msra.mxu0 0.0
    %547 = vmatprep.subr.mxu0 0.0
    %548 = vmatpush2.msra.mxu0 0.0
    %549 = vmatprep.subr.mxu0 0.0
    %550 = vmatpush2.msra.mxu0 0.0
    %551 = vmatprep.subr.mxu0 0.0
    %552 = vmatpush2.msra.mxu0 0.0
    %553 = vmatprep.subr.mxu0 0.0
    %554 = vmatpush2.msra.mxu0 0.0
    %555 = vmatprep.subr.mxu0 0.0
    %556 = vmatpush2.msra.mxu0 0.0
    %557 = vmatprep.subr.mxu0 0.0
    %558 = vmatpush2.msra.mxu0 0.0
    %559 = vmatprep.subr.mxu0 0.0
    %560 = vmatpush2.msra.mxu0 0.0
    %561 = vmatprep.subr.mxu0 0.0
    %562 = vmatpush2.msra.mxu0 0.0
    %563 = vmatprep.subr.mxu0 0.0
    %564 = vmatpush2.msra.mxu0 0.0
    %565 = vmatprep.subr.mxu0 0.0
    %566 = vmatpush2.msra.mxu0 0.0
    %567 = vmatprep.mubr.f32.mxu0 0.0
    %568 = vmatmul.mubr.f32.gmra.mxu0 %v502
    %v569 = vpop.f32.mrf.mxu0
    %v570 = vadd.f32 0.0, %v569
    %v571 = vpop.f32.mrf.mxu0
    %572 = vdwg.mxu0
    %v573 = vadd.f32 %v181, %v570
    %v574 = vtanh.pop %v573
    %575 = vmatprep.subr.mxu0 0.0
    %576 = vmatpush1.msra.mxu0 %v214
    %577 = vmatprep.subr.mxu0 0.0
    %578 = vmatpush1.msra.mxu0 %v213
    %579 = vmatprep.subr.mxu0 0.0
    %580 = vmatpush1.msra.mxu0 %v212
    %581 = vmatprep.subr.mxu0 0.0
    %582 = vmatpush1.msra.mxu0 %v211
    %583 = vmatprep.subr.mxu0 0.0
    %584 = vmatpush1.msra.mxu0 %v210
    %585 = vmatprep.subr.mxu0 0.0
    %586 = vmatpush1.msra.mxu0 %v209
    %587 = vmatprep.subr.mxu0 0.0
    %588 = vmatpush1.msra.mxu0 %v208
    %589 = vmatprep.subr.mxu0 0.0
    %590 = vmatpush1.msra.mxu0 %v207
    %591 = vmatprep.subr.mxu0 0.0
    %592 = vmatpush1.msra.mxu0 %v206
    %593 = vmatprep.subr.mxu0 0.0
    %594 = vmatpush1.msra.mxu0 %v205
    %595 = vmatprep.subr.mxu0 0.0
    %596 = vmatpush1.msra.mxu0 %v204
    %597 = vmatprep.subr.mxu0 0.0
    %598 = vmatpush1.msra.mxu0 %v203
    %599 = vmatprep.subr.mxu0 0.0
    %600 = vmatpush1.msra.mxu0 %v202
    %601 = vmatprep.subr.mxu0 0.0
    %602 = vmatpush1.msra.mxu0 %v201
    %603 = vmatprep.subr.mxu0 0.0
    %604 = vmatpush1.msra.mxu0 %v200
    %605 = vmatprep.subr.mxu0 0.0
    %606 = vmatpush1.msra.mxu0 %v199
    %607 = vmatprep.subr.mxu0 0.0
    %608 = vmatpush2.msra.mxu0 0.0
    %609 = vmatprep.subr.mxu0 0.0
    %610 = vmatpush2.msra.mxu0 0.0
    %611 = vmatprep.subr.mxu0 0.0
    %612 = vmatpush2.msra.mxu0 0.0
    %613 = vmatprep.subr.mxu0 0.0
    %614 = vmatpush2.msra.mxu0 0.0
    %615 = vmatprep.subr.mxu0 0.0
    %616 = vmatpush2.msra.mxu0 0.0
    %617 = vmatprep.subr.mxu0 0.0
    %618 = vmatpush2.msra.mxu0 0.0
    %619 = vmatprep.subr.mxu0 0.0
    %620 = vmatpush2.msra.mxu0 0.0
    %621 = vmatprep.subr.mxu0 0.0
    %622 = vmatpush2.msra.mxu0 0.0
    %623 = vmatprep.subr.mxu0 0.0
    %624 = vmatpush2.msra.mxu0 0.0
    %625 = vmatprep.subr.mxu0 0.0
    %626 = vmatpush2.msra.mxu0 0.0
    %627 = vmatprep.subr.mxu0 0.0
    %628 = vmatpush2.msra.mxu0 0.0
    %629 = vmatprep.subr.mxu0 0.0
    %630 = vmatpush2.msra.mxu0 0.0
    %631 = vmatprep.subr.mxu0 0.0
    %632 = vmatpush2.msra.mxu0 0.0
    %633 = vmatprep.subr.mxu0 0.0
    %634 = vmatpush2.msra.mxu0 0.0
    %635 = vmatprep.subr.mxu0 0.0
    %636 = vmatpush2.msra.mxu0 0.0
    %637 = vmatprep.subr.mxu0 0.0
    %638 = vmatpush2.msra.mxu0 0.0
    %639 = vmatprep.mubr.f32.mxu0 0.0
    %640 = vmatmul.mubr.f32.gmra.mxu0 %v574
    %v641 = vpop.f32.mrf.mxu0
    %v642 = vadd.f32 0.0, %v641
    %v643 = vpop.f32.mrf.mxu0
    %644 = vdwg.mxu0
    %v645 = vadd.f32 %v186, %v642
    %v646 = vtanh.pop %v645
    %647 = vmatprep.subr.mxu0 0.0
    %648 = vmatpush1.msra.mxu0 %v214
    %649 = vmatprep.subr.mxu0 0.0
    %650 = vmatpush1.msra.mxu0 %v213
    %651 = vmatprep.subr.mxu0 0.0
    %652 = vmatpush1.msra.mxu0 %v212
    %653 = vmatprep.subr.mxu0 0.0
    %654 = vmatpush1.msra.mxu0 %v211
    %655 = vmatprep.subr.mxu0 0.0
    %656 = vmatpush1.msra.mxu0 %v210
    %657 = vmatprep.subr.mxu0 0.0
    %658 = vmatpush1.msra.mxu0 %v209
    %659 = vmatprep.subr.mxu0 0.0
    %660 = vmatpush1.msra.mxu0 %v208
    %661 = vmatprep.subr.mxu0 0.0
    %662 = vmatpush1.msra.mxu0 %v207
    %663 = vmatprep.subr.mxu0 0.0
    %664 = vmatpush1.msra.mxu0 %v206
    %665 = vmatprep.subr.mxu0 0.0
    %666 = vmatpush1.msra.mxu0 %v205
    %667 = vmatprep.subr.mxu0 0.0
    %668 = vmatpush1.msra.mxu0 %v204
    %669 = vmatprep.subr.mxu0 0.0
    %670 = vmatpush1.msra.mxu0 %v203
    %671 = vmatprep.subr.mxu0 0.0
    %672 = vmatpush1.msra.mxu0 %v202
    %673 = vmatprep.subr.mxu0 0.0
    %674 = vmatpush1.msra.mxu0 %v201
    %675 = vmatprep.subr.mxu0 0.0
    %676 = vmatpush1.msra.mxu0 %v200
    %677 = vmatprep.subr.mxu0 0.0
    %678 = vmatpush1.msra.mxu0 %v199
    %679 = vmatprep.subr.mxu0 0.0
    %680 = vmatpush2.msra.mxu0 0.0
    %681 = vmatprep.subr.mxu0 0.0
    %682 = vmatpush2.msra.mxu0 0.0
    %683 = vmatprep.subr.mxu0 0.0
    %684 = vmatpush2.msra.mxu0 0.0
    %685 = vmatprep.subr.mxu0 0.0
    %686 = vmatpush2.msra.mxu0 0.0
    %687 = vmatprep.subr.mxu0 0.0
    %688 = vmatpush2.msra.mxu0 0.0
    %689 = vmatprep.subr.mxu0 0.0
    %690 = vmatpush2.msra.mxu0 0.0
    %691 = vmatprep.subr.mxu0 0.0
    %692 = vmatpush2.msra.mxu0 0.0
    %693 = vmatprep.subr.mxu0 0.0
    %694 = vmatpush2.msra.mxu0 0.0
    %695 = vmatprep.subr.mxu0 0.0
    %696 = vmatpush2.msra.mxu0 0.0
    %697 = vmatprep.subr.mxu0 0.0
    %698 = vmatpush2.msra.mxu0 0.0
    %699 = vmatprep.subr.mxu0 0.0
    %700 = vmatpush2.msra.mxu0 0.0
    %701 = vmatprep.subr.mxu0 0.0
    %702 = vmatpush2.msra.mxu0 0.0
    %703 = vmatprep.subr.mxu0 0.0
    %704 = vmatpush2.msra.mxu0 0.0
    %705 = vmatprep.subr.mxu0 0.0
    %706 = vmatpush2.msra.mxu0 0.0
    %707 = vmatprep.subr.mxu0 0.0
    %708 = vmatpush2.msra.mxu0 0.0
    %709 = vmatprep.subr.mxu0 0.0
    %710 = vmatpush2.msra.mxu0 0.0
    %711 = vmatprep.mubr.f32.mxu0 0.0
    %712 = vmatmul.mubr.f32.gmra.mxu0 %v646
    %v713 = vpop.f32.mrf.mxu0
    %v714 = vadd.f32 0.0, %v713
    %v715 = vpop.f32.mrf.mxu0
    %716 = vdwg.mxu0
    %v717 = vadd.f32 %v191, %v714
    %v718 = vtanh.pop %v717
    %719 = vmatprep.subr.mxu0 0.0
    %720 = vmatpush1.msra.mxu0 %v214
    %721 = vmatprep.subr.mxu0 0.0
    %722 = vmatpush1.msra.mxu0 %v213
    %723 = vmatprep.subr.mxu0 0.0
    %724 = vmatpush1.msra.mxu0 %v212
    %725 = vmatprep.subr.mxu0 0.0
    %726 = vmatpush1.msra.mxu0 %v211
    %727 = vmatprep.subr.mxu0 0.0
    %728 = vmatpush1.msra.mxu0 %v210
    %729 = vmatprep.subr.mxu0 0.0
    %730 = vmatpush1.msra.mxu0 %v209
    %731 = vmatprep.subr.mxu0 0.0
    %732 = vmatpush1.msra.mxu0 %v208
    %733 = vmatprep.subr.mxu0 0.0
    %734 = vmatpush1.msra.mxu0 %v207
    %735 = vmatprep.subr.mxu0 0.0
    %736 = vmatpush1.msra.mxu0 %v206
    %737 = vmatprep.subr.mxu0 0.0
    %738 = vmatpush1.msra.mxu0 %v205
    %739 = vmatprep.subr.mxu0 0.0
    %740 = vmatpush1.msra.mxu0 %v204
    %741 = vmatprep.subr.mxu0 0.0
    %742 = vmatpush1.msra.mxu0 %v203
    %743 = vmatprep.subr.mxu0 0.0
    %744 = vmatpush1.msra.mxu0 %v202
    %745 = vmatprep.subr.mxu0 0.0
    %746 = vmatpush1.msra.mxu0 %v201
    %747 = vmatprep.subr.mxu0 0.0
    %748 = vmatpush1.msra.mxu0 %v200
    %749 = vmatprep.subr.mxu0 0.0
    %750 = vmatpush1.msra.mxu0 %v199
    %751 = vmatprep.subr.mxu0 0.0
    %752 = vmatpush2.msra.mxu0 0.0
    %753 = vmatprep.subr.mxu0 0.0
    %754 = vmatpush2.msra.mxu0 0.0
    %755 = vmatprep.subr.mxu0 0.0
    %756 = vmatpush2.msra.mxu0 0.0
    %757 = vmatprep.subr.mxu0 0.0
    %758 = vmatpush2.msra.mxu0 0.0
    %759 = vmatprep.subr.mxu0 0.0
    %760 = vmatpush2.msra.mxu0 0.0
    %761 = vmatprep.subr.mxu0 0.0
    %762 = vmatpush2.msra.mxu0 0.0
    %763 = vmatprep.subr.mxu0 0.0
    %764 = vmatpush2.msra.mxu0 0.0
    %765 = vmatprep.subr.mxu0 0.0
    %766 = vmatpush2.msra.mxu0 0.0
    %767 = vmatprep.subr.mxu0 0.0
    %768 = vmatpush2.msra.mxu0 0.0
    %769 = vmatprep.subr.mxu0 0.0
    %770 = vmatpush2.msra.mxu0 0.0
    %771 = vmatprep.subr.mxu0 0.0
    %772 = vmatpush2.msra.mxu0 0.0
    %773 = vmatprep.subr.mxu0 0.0
    %774 = vmatpush2.msra.mxu0 0.0
    %775 = vmatprep.subr.mxu0 0.0
    %776 = vmatpush2.msra.mxu0 0.0
    %777 = vmatprep.subr.mxu0 0.0
    %778 = vmatpush2.msra.mxu0 0.0
    %779 = vmatprep.subr.mxu0 0.0
    %780 = vmatpush2.msra.mxu0 0.0
    %781 = vmatprep.subr.mxu0 0.0
    %782 = vmatpush2.msra.mxu0 0.0
    %783 = vmatprep.mubr.f32.mxu0 0.0
    %784 = vmatmul.mubr.f32.gmra.mxu0 %v718
    %v785 = vpop.f32.mrf.mxu0
    %v786 = vadd.f32 0.0, %v785
    %v787 = vpop.f32.mrf.mxu0
    %788 = vdwg.mxu0
    %v789 = vadd.f32 %v196, %v786
    %v790 = vtanh.pop %v789
    %v791 = vld [vmem:[#allocation5] sm:$0xff]
    %v792 = vld [vmem:[#allocation5 + $0x8] sm:$0xff]
    %v793 = vld [vmem:[#allocation5 + $0x10] sm:$0xff]
    %v794 = vld [vmem:[#allocation5 + $0x18] sm:$0xff]
    %v795 = vld [vmem:[#allocation5 + $0x20] sm:$0xff]
    %v796 = vld [vmem:[#allocation5 + $0x28] sm:$0xff]
    %v797 = vld [vmem:[#allocation5 + $0x30] sm:$0xff]
    %v798 = vld [vmem:[#allocation5 + $0x38] sm:$0xff]
    %v799 = vld [vmem:[#allocation5 + $0x40] sm:$0xff]
    %v800 = vld [vmem:[#allocation5 + $0x48] sm:$0xff]
    %v801 = vld [vmem:[#allocation5 + $0x50] sm:$0xff]
    %v802 = vld [vmem:[#allocation5 + $0x58] sm:$0xff]
    %v803 = vld [vmem:[#allocation5 + $0x60] sm:$0xff]
    %v804 = vld [vmem:[#allocation5 + $0x68] sm:$0xff]
    %v805 = vld [vmem:[#allocation5 + $0x70] sm:$0xff]
    %v806 = vld [vmem:[#allocation5 + $0x78] sm:$0xff]
    %v807 = vld [vmem:[%s5] sm:$0x1]
    %v809 = vlaneseq
    %v810 = vshrl.u32 %v809, 7
    %v811 = vsub.s32 0, %v810
    %v812 = vrot.slane %v807, %v811
    %814 = vmatprep.subr.mxu0 0.0
    %815 = vmatpush1.msra.mxu0 %v806
    %816 = vmatprep.subr.mxu0 0.0
    %817 = vmatpush1.msra.mxu0 %v805
    %818 = vmatprep.subr.mxu0 0.0
    %819 = vmatpush1.msra.mxu0 %v804
    %820 = vmatprep.subr.mxu0 0.0
    %821 = vmatpush1.msra.mxu0 %v803
    %822 = vmatprep.subr.mxu0 0.0
    %823 = vmatpush1.msra.mxu0 %v802
    %824 = vmatprep.subr.mxu0 0.0
    %825 = vmatpush1.msra.mxu0 %v801
    %826 = vmatprep.subr.mxu0 0.0
    %827 = vmatpush1.msra.mxu0 %v800
    %828 = vmatprep.subr.mxu0 0.0
    %829 = vmatpush1.msra.mxu0 %v799
    %830 = vmatprep.subr.mxu0 0.0
    %831 = vmatpush1.msra.mxu0 %v798
    %832 = vmatprep.subr.mxu0 0.0
    %833 = vmatpush1.msra.mxu0 %v797
    %834 = vmatprep.subr.mxu0 0.0
    %835 = vmatpush1.msra.mxu0 %v796
    %836 = vmatprep.subr.mxu0 0.0
    %837 = vmatpush1.msra.mxu0 %v795
    %838 = vmatprep.subr.mxu0 0.0
    %839 = vmatpush1.msra.mxu0 %v794
    %840 = vmatprep.subr.mxu0 0.0
    %841 = vmatpush1.msra.mxu0 %v793
    %842 = vmatprep.subr.mxu0 0.0
    %843 = vmatpush1.msra.mxu0 %v792
    %844 = vmatprep.subr.mxu0 0.0
    %845 = vmatpush1.msra.mxu0 %v791
    %846 = vmatprep.subr.mxu0 0.0
    %847 = vmatpush2.msra.mxu0 0.0
    %848 = vmatprep.subr.mxu0 0.0
    %849 = vmatpush2.msra.mxu0 0.0
    %850 = vmatprep.subr.mxu0 0.0
    %851 = vmatpush2.msra.mxu0 0.0
    %852 = vmatprep.subr.mxu0 0.0
    %853 = vmatpush2.msra.mxu0 0.0
    %854 = vmatprep.subr.mxu0 0.0
    %855 = vmatpush2.msra.mxu0 0.0
    %856 = vmatprep.subr.mxu0 0.0
    %857 = vmatpush2.msra.mxu0 0.0
    %858 = vmatprep.subr.mxu0 0.0
    %859 = vmatpush2.msra.mxu0 0.0
    %860 = vmatprep.subr.mxu0 0.0
    %861 = vmatpush2.msra.mxu0 0.0
    %862 = vmatprep.subr.mxu0 0.0
    %863 = vmatpush2.msra.mxu0 0.0
    %864 = vmatprep.subr.mxu0 0.0
    %865 = vmatpush2.msra.mxu0 0.0
    %866 = vmatprep.subr.mxu0 0.0
    %867 = vmatpush2.msra.mxu0 0.0
    %868 = vmatprep.subr.mxu0 0.0
    %869 = vmatpush2.msra.mxu0 0.0
    %870 = vmatprep.subr.mxu0 0.0
    %871 = vmatpush2.msra.mxu0 0.0
    %872 = vmatprep.subr.mxu0 0.0
    %873 = vmatpush2.msra.mxu0 0.0
    %874 = vmatprep.subr.mxu0 0.0
    %875 = vmatpush2.msra.mxu0 0.0
    %876 = vmatprep.subr.mxu0 0.0
    %877 = vmatpush2.msra.mxu0 0.0
    %878 = vmatprep.mubr.f32.mxu0 0.0
    %879 = vmatmul.mubr.f32.gmra.mxu0 %v790
    %v880 = vpop.f32.mrf.mxu0
    %v881 = vadd.f32 %v812, %v880
    %v882 = vpop.f32.mrf.mxu0
    %883 = vdwg.mxu0
    %884 = vst [vmem:[#allocation7] sm:$0xff] %v881
    // Predicated region
    $region34: #{tpu_custom_call.1} parent=1 // pred_check
      _
    $region35: #{tpu_custom_call.1} parent=1 // pred_check_branch
      %886 = sbr.rel (0) target = $region37
    $region36: #{tpu_custom_call.1} parent=1 // pred_region
      %s888 = ssub.s32 128, 128
      %889 = vsyncadd [#allocation4], %s888
      %s891 = sshll.u32 [#allocation7], 4
      %s892 = int_to_ptr.vmem [resolvable:$true] %s891
      %894 = dma.vmem_to_hbm [thread:$0]  %s892, 128, %s6, [#allocation4]
    $region37: #{tpu_custom_call.1} parent=1 // pred_fallthru
      _
    // Predicated region
    $region38: #{tpu_custom_call.1} parent=1 // pred_check
      _
    $region39: #{tpu_custom_call.1} parent=1 // pred_check_branch
      %896 = sbr.rel (0) target = $region41
    $region40: #{tpu_custom_call.1} parent=1 // pred_region
      %897 = dma.done [#allocation4], 128
    $region41: #{tpu_custom_call.1} parent=1 // pred_fallthru
      _
    %898 = vsyncpa [#allocation3], 1
    %899 = vsyncpa [#allocation6], 1
    %900 = vsyncpa [#allocation4], 1

</llo_original>
